<compile_context>
chip_gen: v7x
topology: tpu7x:2x2x1
jax: 0.10.0
libtpu: 0.0.40
codegen_flags: <defaults>
</compile_context>

<pallas_src>
import functools

import jax
import jax.numpy as jnp
from jax.experimental import pallas as pl
from jax.experimental.pallas import tpu as pltpu


def _vmem_limit_bytes():
    """Generation-aware scoped-VMEM limit (safe on v5e/v6e/v7x)."""
    cap = 0
    try:
        cap = int(getattr(pltpu.get_tpu_info(), "vmem_capacity_bytes", 0))
    except Exception:
        cap = 0
    if cap <= 0:
        cap = 64 * 1024 * 1024
    # Be conservative in case the query reports chip-level capacity on a
    # 2-TensorCore chip: per-TC VMEM is 128 MiB (v5e/v6e) / 64 MiB (v7x).
    per_core = min(cap, 64 * 1024 * 1024)
    # Leave headroom for Mosaic-internal scratch.
    return (per_core * 7) // 8


def _combined_mse_kernel(*refs, use_target_weight, split_channels, hw, tr,
                         steps_per_split, num_blocks, total_rows, needs_mask):
    """Grid = (split, step).  Accumulates row-reduced squared errors."""
    if split_channels:
        if use_target_weight:
            (hp_ref, oxp_ref, oyp_ref, hg_ref, oxg_ref, oyg_ref,
             tw_ref, out_ref, acc_ref) = refs
        else:
            (hp_ref, oxp_ref, oyp_ref, hg_ref, oxg_ref, oyg_ref,
             out_ref, acc_ref) = refs
            tw_ref = None
    else:
        if use_target_weight:
            x_ref, t_ref, tw_ref, out_ref, acc_ref = refs
        else:
            x_ref, t_ref, out_ref, acc_ref = refs
            tw_ref = None

    s = pl.program_id(0)          # split index ("parallel" axis, 2-TC shardable)
    j = pl.program_id(1)          # step within split ("arbitrary" accumulation)

    @pl.when(j == 0)
    def _init():
        acc_ref[...] = jnp.zeros_like(acc_ref)

    f32 = jnp.float32
    if split_channels:
        # Each ref is already a lane-aligned (tr, hw) channel slab.
        hp = hp_ref[...].astype(f32)
        oxp = oxp_ref[...].astype(f32)
        oyp = oyp_ref[...].astype(f32)
        hg = hg_ref[...].astype(f32)
        oxg = oxg_ref[...].astype(f32)
        oyg = oyg_ref[...].astype(f32)
    else:
        # hw % 128 == 0 here, so these static slices are lane-aligned views.
        hp = x_ref[:, 0:hw].astype(f32)
        oxp = x_ref[:, hw:2 * hw].astype(f32)
        oyp = x_ref[:, 2 * hw:3 * hw].astype(f32)
        hg = t_ref[:, 0:hw].astype(f32)
        oxg = t_ref[:, hw:2 * hw].astype(f32)
        oyg = t_ref[:, 2 * hw:3 * hw].astype(f32)

    if use_target_weight:
        w = tw_ref[...].astype(f32)            # [tr, 1] per-(sample, joint)
        hp = hp * w
        hg = hg * w                            # weighted gt also gates offsets

    d1 = hp - hg
    d2 = hg * (oxp - oxg)
    d3 = hg * (oyp - oyg)
    sq = d1 * d1 + d2 * d2 + d3 * d3           # [tr, hw]

    if needs_mask:
        block_idx = s * steps_per_split + j
        is_tail = block_idx == num_blocks - 1

        @pl.when(is_tail)
        def _masked_accum():
            rows = block_idx * tr + jax.lax.broadcasted_iota(
                jnp.int32, (tr, 1), 0)
            masked = jnp.where(rows < total_rows, sq, 0.0)
            acc_ref[...] += jnp.sum(masked, axis=0, keepdims=True)

        @pl.when(jnp.logical_not(is_tail))
        def _accum():
            acc_ref[...] += jnp.sum(sq, axis=0, keepdims=True)
    else:
        acc_ref[...] += jnp.sum(sq, axis=0, keepdims=True)

    @pl.when(j == pl.num_programs(1) - 1)
    def _finalize():
        # Lane-reduce to one scalar per split: wrapper only sums <= 2 scalars.
        out_ref[...] = jnp.sum(acc_ref[...], axis=1, keepdims=True)


def combined_target_mse_loss(output, target, target_weights,
                             use_target_weight=False, loss_weight=1.0,
                             max_block_rows=None, buffer_count=None):
    """Pallas TPU implementation of CombinedTargetMSELoss.forward."""
    B, C, H, W = output.shape
    assert C % 3 == 0, "num_channels must be 3 * num_keypoints"
    K = C // 3
    HW = H * W
    CW = 3 * HW
    total_rows = B * K

    itemsize = jnp.dtype(output.dtype).itemsize
    vmem_limit = _vmem_limit_bytes()
    nbuf = 2 if buffer_count is None else max(2, int(buffer_count))

    # Row-tile sizing: live input blocks (2 tensors x nbuf pipeline buffers,
    # plus the lane-padded per-row weight block) get ~45% of the scoped VMEM
    # limit; the rest covers f32 temporaries, the tiny [1,HW] accumulator and
    # compiler slack.
    per_row = nbuf * (2 * CW * itemsize + (128 * 4 if use_target_weight else 0))
    input_budget = (vmem_limit * 9) // 20
    max_rows = max(8, (input_budget // per_row) // 8 * 8)
    if max_block_rows is not None:
        max_rows = min(max_rows, max(8, (int(max_block_rows) // 8) * 8))
    tr = total_rows if total_rows <= max_rows else max_rows

    num_blocks = pl.cdiv(total_rows, tr)
    # Use a 2-way "parallel" split (v7x megacore) only when it divides evenly,
    # so single-TC v5e/v6e never pay for a duplicated, masked-away tail block.
    ns = 2 if (num_blocks >= 2 and num_blocks % 2 == 0) else 1
    sps = num_blocks // ns
    needs_mask = num_blocks * tr != total_rows

    split_channels = (HW % 128) != 0

    extra_spec_kwargs = {}
    if nbuf > 2:
        extra_spec_kwargs = dict(pipeline_mode=pl.Buffered(nbuf))

    if split_channels:
        # [B,C,H,W] -> [B*K, 3, HW] (free, contiguity-preserving).  One
        # BlockSpec per channel keeps every kernel view lane-aligned.
        x = output.reshape(total_rows, 3, HW)
        t = target.reshape(total_rows, 3, HW)

        def chan_spec(c):
            return pl.BlockSpec((tr, None, HW),
                                lambda si, ji, c=c: (si * sps + ji, c, 0),
                                **extra_spec_kwargs)

        in_specs = [chan_spec(0), chan_spec(1), chan_spec(2),
                    chan_spec(0), chan_spec(1), chan_spec(2)]
        args = [x, x, x, t, t, t]
    else:
        # [B,C,H,W] -> [B*K, 3*HW] (free).  Fully contiguous, largest DMAs.
        x = output.reshape(total_rows, CW)
        t = target.reshape(total_rows, CW)
        data_spec = pl.BlockSpec((tr, CW), lambda si, ji: (si * sps + ji, 0),
                                 **extra_spec_kwargs)
        in_specs = [data_spec, data_spec]
        args = [x, t]

    if use_target_weight:
        tw = target_weights.reshape(total_rows, 1)
        in_specs.append(
            pl.BlockSpec((tr, 1), lambda si, ji: (si * sps + ji, 0)))
        args.append(tw)

    kernel = functools.partial(
        _combined_mse_kernel,
        use_target_weight=bool(use_target_weight),
        split_channels=split_channels,
        hw=HW, tr=tr, steps_per_split=sps, num_blocks=num_blocks,
        total_rows=total_rows, needs_mask=needs_mask)

    bytes_accessed = 2 * total_rows * CW * itemsize + ns * 4
    if use_target_weight:
        bytes_accessed += total_rows * jnp.dtype(target_weights.dtype).itemsize
    cost = pl.CostEstimate(flops=12 * total_rows * HW, transcendentals=0,
                           bytes_accessed=int(bytes_accessed))

    partials = pl.pallas_call(
        kernel,
        out_shape=jax.ShapeDtypeStruct((ns, 1, 1), jnp.float32),
        grid_spec=pltpu.PrefetchScalarGridSpec(
            num_scalar_prefetch=0,
            grid=(ns, sps),
            in_specs=in_specs,
            out_specs=pl.BlockSpec((None, 1, 1), lambda si, ji: (si, 0, 0)),
            scratch_shapes=[pltpu.VMEM((1, HW), jnp.float32)]),
        compiler_params=pltpu.CompilerParams(
            dimension_semantics=("parallel", "arbitrary"),
            vmem_limit_bytes=int(vmem_limit)),
        cost_estimate=cost,
    )(*args)

    scale = 0.5 * float(loss_weight) / float(B * HW * K)
    return jnp.sum(partials) * scale


def _reference_loss(output, target, target_weights, use_target_weight, loss_weight):
    """Pure-JAX transcription of the PyTorch forward (for verification)."""
    B, C, H, W = output.shape
    K = C // 3
    hp_all = output.reshape(B, C, -1).astype(jnp.float32)
    hg_all = target.reshape(B, C, -1).astype(jnp.float32)
    loss = 0.0
    for idx in range(K):
        heatmap_pred = hp_all[:, idx * 3]
        heatmap_gt = hg_all[:, idx * 3]
        offx_pred = hp_all[:, idx * 3 + 1]
        offx_gt = hg_all[:, idx * 3 + 1]
        offy_pred = hp_all[:, idx * 3 + 2]
        offy_gt = hg_all[:, idx * 3 + 2]
        if use_target_weight:
            twj = target_weights[:, idx, None].astype(jnp.float32)
            heatmap_pred = heatmap_pred * twj
            heatmap_gt = heatmap_gt * twj
        loss += 0.5 * jnp.mean((heatmap_pred - heatmap_gt) ** 2)
        loss += 0.5 * jnp.mean((heatmap_gt * offx_pred - heatmap_gt * offx_gt) ** 2)
        loss += 0.5 * jnp.mean((heatmap_gt * offy_pred - heatmap_gt * offy_gt) ** 2)
    return loss / K * loss_weight


if __name__ == "__main__":
    key = jax.random.PRNGKey(0)
    ok = True

    def check(B, K, H, W, use_tw, lw, max_block_rows=None, seed_offset=0):
        global ok
        C = 3 * K
        k1, k2, k3 = jax.random.split(jax.random.fold_in(key, seed_offset), 3)
        output = jax.random.normal(k1, (B, C, H, W), dtype=jnp.float32)
        target = jax.random.normal(k2, (B, C, H, W), dtype=jnp.float32)
        tweights = jax.random.uniform(k3, (B, K), dtype=jnp.float32)
        got = combined_target_mse_loss(output, target, tweights,
                                       use_target_weight=use_tw,
                                       loss_weight=lw,
                                       max_block_rows=max_block_rows)
        got = jax.block_until_ready(got)
        want = jax.block_until_ready(
            _reference_loss(output, target, tweights, use_tw, lw))
        if not jnp.allclose(got, want, rtol=1e-4, atol=1e-6):
            ok = False
            print(f"MISMATCH B={B} K={K} H={H} W={W} use_tw={use_tw}: "
                  f"got={got}, want={want}")

    # Fused (HW % 128 == 0) path: single block, both weight modes.
    check(B=2, K=4, H=16, W=16, use_tw=False, lw=1.0, seed_offset=0)
    check(B=2, K=4, H=16, W=16, use_tw=True, lw=2.0, seed_offset=1)
    # Fused path: multi-block, 2-way split, partial-tail mask.
    check(B=3, K=5, H=16, W=16, use_tw=True, lw=0.5,
          max_block_rows=8, seed_offset=2)
    # Channel-split (HW % 128 != 0) path: single block and multi-block tail.
    check(B=2, K=2, H=12, W=12, use_tw=True, lw=1.0, seed_offset=3)
    check(B=3, K=3, H=12, W=12, use_tw=False, lw=1.5,
          max_block_rows=8, seed_offset=4)

    if ok:
        print("KERNEL_OK")
</pallas_src>

<mosaic_0001>
module attributes {stable_mosaic.version = 11 : i64} {
  func.func @_combined_mse_kernel(%arg0: i32, %arg1: i32, %arg2: memref<8x768xf32, #tpu.memory_space<vmem>>, %arg3: memref<8x768xf32, #tpu.memory_space<vmem>>, %arg4: memref<1x1x1xf32, #tpu.memory_space<vmem>>, %arg5: memref<1x256xf32, #tpu.memory_space<vmem>>) attributes {dimension_semantics = [#tpu.dimension_semantics<parallel>, #tpu.dimension_semantics<arbitrary>], iteration_bounds = array<i64: 1, 1>, scalar_prefetch = 0 : i64, scratch_operands = 1 : i64, tpu.core_type = #tpu.core_type<tc>, window_params = [{transform_indices = @transform_0, window_bounds = array<i64: 8, 768>}, {transform_indices = @transform_1, window_bounds = array<i64: 8, 768>}, {transform_indices = @transform_2, window_bounds = array<i64: 1, 1, 1>}]} {
    %c0_i32 = arith.constant 0 : i32
    %0 = arith.cmpi eq, %arg1, %c0_i32 : i32
    %1 = arith.extui %0 : i1 to i32
    %c0_i32_0 = arith.constant 0 : i32
    %2 = arith.cmpi ne, %1, %c0_i32_0 : i32
    scf.if %2 {
      %cst_16 = arith.constant 0.000000e+00 : f32
      %27 = vector.broadcast %cst_16 : f32 to vector<1x256xf32>
      %c0_17 = arith.constant 0 : index
      %c0_18 = arith.constant 0 : index
      %28 = vector.load %arg5[%c0_17, %c0_18] : memref<1x256xf32, #tpu.memory_space<vmem>>, vector<1x256xf32>
      tpu.vector_store %arg5[%c0_17, %c0_18], %27 {strides = array<i32>} : memref<1x256xf32, #tpu.memory_space<vmem>>, vector<1x256xf32>,
    } else {
    }
    %c0 = arith.constant 0 : index
    %c0_1 = arith.constant 0 : index
    %3 = vector.load %arg2[%c0, %c0_1] : memref<8x768xf32, #tpu.memory_space<vmem>>, vector<8x256xf32>
    %c0_2 = arith.constant 0 : index
    %c256 = arith.constant 256 : index
    %4 = vector.load %arg2[%c0_2, %c256] : memref<8x768xf32, #tpu.memory_space<vmem>>, vector<8x256xf32>
    %c0_3 = arith.constant 0 : index
    %c512 = arith.constant 512 : index
    %5 = vector.load %arg2[%c0_3, %c512] : memref<8x768xf32, #tpu.memory_space<vmem>>, vector<8x256xf32>
    %c0_4 = arith.constant 0 : index
    %c0_5 = arith.constant 0 : index
    %6 = vector.load %arg3[%c0_4, %c0_5] : memref<8x768xf32, #tpu.memory_space<vmem>>, vector<8x256xf32>
    %c0_6 = arith.constant 0 : index
    %c256_7 = arith.constant 256 : index
    %7 = vector.load %arg3[%c0_6, %c256_7] : memref<8x768xf32, #tpu.memory_space<vmem>>, vector<8x256xf32>
    %c0_8 = arith.constant 0 : index
    %c512_9 = arith.constant 512 : index
    %8 = vector.load %arg3[%c0_8, %c512_9] : memref<8x768xf32, #tpu.memory_space<vmem>>, vector<8x256xf32>
    %9 = arith.subf %3, %6 : vector<8x256xf32>
    %10 = arith.subf %4, %7 : vector<8x256xf32>
    %11 = arith.mulf %6, %10 : vector<8x256xf32>
    %12 = arith.subf %5, %8 : vector<8x256xf32>
    %13 = arith.mulf %6, %12 : vector<8x256xf32>
    %14 = arith.mulf %9, %9 : vector<8x256xf32>
    %15 = arith.mulf %11, %11 : vector<8x256xf32>
    %16 = arith.addf %14, %15 : vector<8x256xf32>
    %17 = arith.mulf %13, %13 : vector<8x256xf32>
    %18 = arith.addf %16, %17 : vector<8x256xf32>
    %c0_10 = arith.constant 0 : index
    %c0_11 = arith.constant 0 : index
    %19 = vector.load %arg5[%c0_10, %c0_11] : memref<1x256xf32, #tpu.memory_space<vmem>>, vector<1x256xf32>
    %cst = arith.constant dense<0.000000e+00> : vector<256xf32>
    %20 = vector.multi_reduction <add>, %18, %cst [0] : vector<8x256xf32> to vector<256xf32>
    %21 = vector.shape_cast %20 : vector<256xf32> to vector<1x256xf32>
    %22 = arith.addf %19, %21 : vector<1x256xf32>
    %c0_12 = arith.constant 0 : index
    %c0_13 = arith.constant 0 : index
    %23 = vector.load %arg5[%c0_12, %c0_13] : memref<1x256xf32, #tpu.memory_space<vmem>>, vector<1x256xf32>
    tpu.vector_store %arg5[%c0_12, %c0_13], %22 {strides = array<i32>} : memref<1x256xf32, #tpu.memory_space<vmem>>, vector<1x256xf32>,
    %c0_i32_14 = arith.constant 0 : i32
    %24 = arith.cmpi eq, %arg1, %c0_i32_14 : i32
    %25 = arith.extui %24 : i1 to i32
    %c0_i32_15 = arith.constant 0 : i32
    %26 = arith.cmpi ne, %25, %c0_i32_15 : i32
    scf.if %26 {
      %c0_16 = arith.constant 0 : index
      %c0_17 = arith.constant 0 : index
      %27 = vector.load %arg5[%c0_16, %c0_17] : memref<1x256xf32, #tpu.memory_space<vmem>>, vector<1x256xf32>
      %cst_18 = arith.constant dense<0.000000e+00> : vector<1xf32>
      %28 = vector.multi_reduction <add>, %27, %cst_18 [1] : vector<1x256xf32> to vector<1xf32>
      %29 = vector.shape_cast %28 : vector<1xf32> to vector<1x1xf32>
      %c0_19 = arith.constant 0 : index
      %c0_20 = arith.constant 0 : index
      %c0_21 = arith.constant 0 : index
      %30 = vector.load %arg4[%c0_19, %c0_20, %c0_21] : memref<1x1x1xf32, #tpu.memory_space<vmem>>, vector<1x1x1xf32>
      %31 = vector.shape_cast %30 : vector<1x1x1xf32> to vector<1x1xf32>
      %32 = vector.shape_cast %29 : vector<1x1xf32> to vector<1x1x1xf32>
      tpu.vector_store %arg4[%c0_19, %c0_20, %c0_21], %32 {strides = array<i32>} : memref<1x1x1xf32, #tpu.memory_space<vmem>>, vector<1x1x1xf32>,
    } else {
    }
    return
  }
  func.func @transform_0(%arg0: i32, %arg1: i32) -> (i32, i32) {
    %c1_i32 = arith.constant 1 : i32
    %0 = arith.muli %arg0, %c1_i32 : i32
    %1 = arith.addi %0, %arg1 : i32
    %c0_i32 = arith.constant 0 : i32
    %c0_i32_0 = arith.constant 0 : i32
    return %1, %c0_i32 : i32, i32
  }
  func.func @transform_1(%arg0: i32, %arg1: i32) -> (i32, i32) {
    %c1_i32 = arith.constant 1 : i32
    %0 = arith.muli %arg0, %c1_i32 : i32
    %1 = arith.addi %0, %arg1 : i32
    %c0_i32 = arith.constant 0 : i32
    %c0_i32_0 = arith.constant 0 : i32
    return %1, %c0_i32 : i32, i32
  }
  func.func @transform_2(%arg0: i32, %arg1: i32) -> (i32, i32, i32) {
    %c0_i32 = arith.constant 0 : i32
    %c0_i32_0 = arith.constant 0 : i32
    %c0_i32_1 = arith.constant 0 : i32
    return %arg0, %c0_i32, %c0_i32_0 : i32, i32, i32
  }
}

</mosaic_0001>

<llo_original>
// kernel: tpu_custom_call.1
$region0: #{tpu_custom_call.1}
  #allocation0 [shape = 'u32[]', space=smem, size = 0x4, offset = 0x4, fixed_abs, tag = 'smem constant byte address 0x4 - core index']
  #allocation1 [shape = 'u32[144,128]{1,0:T(1,128)}', space=vmem, size = 0x12000, scoped, tag = 'internal scratch']
  #allocation2 [shape = 'f32[1,256]{1,0:T(1,128)}', space=vmem, size = 0x400, scoped, tag = 'scratch operand']
  %s0 = inlined_call_operand.hbm [shape: f32[8,768], index: 0, kind: input, shape index: {}]
  %s1 = inlined_call_operand.hbm [shape: f32[8,768], index: 1, kind: input, shape index: {}]
  %s2 = inlined_call_operand.hbm [shape: f32[1,1,1], index: 2, kind: output, shape index: {}]
  %s3 = sld [smem:[#allocation0]]
  $region34: #{tpu_custom_call.1} parent=0
    _
  %s5 = ssub.s32 1, %s3
  %s6 = scalar_select 0, %s5, %s3
  $region1: #{tpu_custom_call.1} parent=0
    #allocation3 [shape = 'u8[24576]{0}', space=vmem, size = 0x6000, scoped, tag = 'input window, operand 0, single buffered']
    #allocation4 [shape = 's32[1]{0}', space=sflag, size = 0x4, scoped, tag = 'scoped memory for tpu_custom_call.1']
    #allocation5 [shape = 's32[1]{0}', space=sflag, size = 0x4, scoped, tag = 'scoped memory for tpu_custom_call.1']
    #allocation6 [shape = 'u8[24576]{0}', space=vmem, size = 0x6000, scoped, tag = 'input window, operand 1, single buffered']
    #allocation7 [shape = 's32[1]{0}', space=sflag, size = 0x4, scoped, tag = 'scoped memory for tpu_custom_call.1']
    #allocation8 [shape = 'u8[512]{0}', space=vmem, size = 0x400, scoped, tag = 'output window, operand 0, single buffered']
    %7 = vsyncpa [#allocation4], 0
    %8 = vsyncpa [#allocation7], 0
    %9 = vsyncpa [#allocation5], 0
    // Predicated region
    $region2: #{tpu_custom_call.1} parent=1 // pred_check
      _
    $region3: #{tpu_custom_call.1} parent=1 // pred_check_branch
      %11 = sbr.rel (0) target = $region5
    $region4: #{tpu_custom_call.1} parent=1 // pred_region
      %s12 = sadd.s32 0, 0
      %s14 = ssub.s32 768, 768
      %15 = vsyncadd [#allocation4], %s14
      %s16 = smul.addr %s12, 6
      %s17 = smul.addr %s16, 128
      %s18 = scalar_lea.hbm %s0, %s17
      %s20 = sshll.u32 [#allocation3], 4
      %s21 = int_to_ptr.vmem [resolvable:$true] %s20
      %23 = dma.hbm_to_vmem [thread:$0]  %s18, 768, %s21, [#allocation4]
    $region5: #{tpu_custom_call.1} parent=1 // pred_fallthru
      _
    // Predicated region
    $region6: #{tpu_custom_call.1} parent=1 // pred_check
      _
    $region7: #{tpu_custom_call.1} parent=1 // pred_check_branch
      %25 = sbr.rel (0) target = $region9
    $region8: #{tpu_custom_call.1} parent=1 // pred_region
      %s26 = sadd.s32 0, 0
      %s28 = ssub.s32 768, 768
      %29 = vsyncadd [#allocation7], %s28
      %s30 = smul.addr %s26, 6
      %s31 = smul.addr %s30, 128
      %s32 = scalar_lea.hbm %s1, %s31
      %s34 = sshll.u32 [#allocation6], 4
      %s35 = int_to_ptr.vmem [resolvable:$true] %s34
      %37 = dma.hbm_to_vmem [thread:$0]  %s32, 768, %s35, [#allocation7]
    $region9: #{tpu_custom_call.1} parent=1 // pred_fallthru
      _
    // Predicated region
    $region10: #{tpu_custom_call.1} parent=1 // pred_check
      _
    $region11: #{tpu_custom_call.1} parent=1 // pred_check_branch
      %39 = sbr.rel (0) target = $region13
    $region12: #{tpu_custom_call.1} parent=1 // pred_region
      %40 = dma.done [#allocation4], 768
    $region13: #{tpu_custom_call.1} parent=1 // pred_fallthru
      _
    // Predicated region
    $region14: #{tpu_custom_call.1} parent=1 // pred_check
      _
    $region15: #{tpu_custom_call.1} parent=1 // pred_check_branch
      %42 = sbr.rel (0) target = $region17
    $region16: #{tpu_custom_call.1} parent=1 // pred_region
      %43 = dma.done [#allocation7], 768
    $region17: #{tpu_custom_call.1} parent=1 // pred_fallthru
      _
    %s44 = sadd.s32 0, 0
    %s45 = sadd.s32 0, 0
    %p46 = scmp.eq.s32.totalorder 0, 0
    // Predicated region
    $region18: #{tpu_custom_call.1} parent=1 // pred_check
      %p47 = pneg %p46
    $region19: #{tpu_custom_call.1} parent=1 // pred_check_branch
      %49 = sbr.rel (%p47) target = $region21
    $region20: #{tpu_custom_call.1} parent=1 // pred_region
      %v50 = vlaneseq
      %vm51 = vcmp.ge.s32.totalorder %v50, 0
      %vm52 = vcmp.lt.s32.totalorder %v50, 256
      %vm53 = vmand %vm51, %vm52
      %54 = vst.msk [vmem:[#allocation2] sm:$0x3] %vm53, 0.0
    $region21: #{tpu_custom_call.1} parent=1 // pred_fallthru
      _
    %v55 = vld [vmem:[#allocation3] sm:$0xff]
    %v56 = vld [vmem:[#allocation3 + $0x8] sm:$0xff]
    %v57 = vld [vmem:[#allocation3 + $0x10] sm:$0xff]
    %v58 = vld [vmem:[#allocation3 + $0x18] sm:$0xff]
    %v59 = vld [vmem:[#allocation3 + $0x20] sm:$0xff]
    %v60 = vld [vmem:[#allocation3 + $0x28] sm:$0xff]
    %v61 = vld [vmem:[#allocation6] sm:$0xff]
    %v62 = vld [vmem:[#allocation6 + $0x8] sm:$0xff]
    %v63 = vld [vmem:[#allocation6 + $0x10] sm:$0xff]
    %v64 = vld [vmem:[#allocation6 + $0x18] sm:$0xff]
    %v65 = vld [vmem:[#allocation6 + $0x20] sm:$0xff]
    %v66 = vld [vmem:[#allocation6 + $0x28] sm:$0xff]
    %v67 = vsub.f32 %v55, %v61
    %v68 = vsub.f32 %v56, %v62
    %v69 = vsub.f32 %v57, %v63
    %v70 = vsub.f32 %v58, %v64
    %v71 = vmul.f32 %v61, %v69
    %v72 = vmul.f32 %v62, %v70
    %v73 = vsub.f32 %v59, %v65
    %v74 = vsub.f32 %v60, %v66
    %v75 = vmul.f32 %v61, %v73
    %v76 = vmul.f32 %v62, %v74
    %v77 = vmul.f32 %v67, %v67
    %v78 = vmul.f32 %v68, %v68
    %v79 = vmul.f32 %v71, %v71
    %v80 = vmul.f32 %v72, %v72
    %v81 = vadd.f32 %v77, %v79
    %v82 = vadd.f32 %v78, %v80
    %v83 = vmul.f32 %v75, %v75
    %v84 = vmul.f32 %v76, %v76
    %v85 = vadd.f32 %v81, %v83
    %v86 = vadd.f32 %v82, %v84
    %v87 = vld [vmem:[#allocation2] sm:$0x3]
    %v88 = vrot.slane %v85, 4
    %v89 = vadd.f32 %v85, %v88
    %v90 = vrot.slane %v89, 2
    %v91 = vadd.f32 %v89, %v90
    %v92 = vrot.slane %v91, 1
    %v93 = vadd.f32 %v91, %v92
    %v94 = vrot.slane %v86, 4
    %v95 = vadd.f32 %v86, %v94
    %v96 = vrot.slane %v95, 2
    %v97 = vadd.f32 %v95, %v96
    %v98 = vrot.slane %v97, 1
    %v99 = vadd.f32 %v97, %v98
    %v102 = vcombine.low %v93, %v99
    %v104 = vunpack.c.l.s4 1966171168
    %v105 = vunpack.c.0.s8 %v104
    %v106 = vlaneseq
    %v107 = vshrl.u32 %v106, 7
    %v108 = vsub.s32 %v105, %v107
    %v109 = vrot.slane %v102, %v108
    %v111 = vunpack.c.l.s4 1966171168
    %v112 = vunpack.c.0.s8 %v111
    %v113 = vlaneseq
    %v114 = vshrl.u32 %v113, 7
    %v115 = vsub.s32 %v112, %v114
    %v116 = vrot.slane %v109, %v115
    %v118 = vadd.f32 %v87, %v116
    %v119 = vlaneseq
    %vm120 = vcmp.ge.s32.totalorder %v119, 0
    %vm121 = vcmp.lt.s32.totalorder %v119, 256
    %vm122 = vmand %vm120, %vm121
    %123 = vst.msk [vmem:[#allocation2] sm:$0x3] %vm122, %v118
    // Predicated region
    $region22: #{tpu_custom_call.1} parent=1 // pred_check
      %p124 = pneg %p46
    $region23: #{tpu_custom_call.1} parent=1 // pred_check_branch
      %126 = sbr.rel (%p124) target = $region25
    $region24: #{tpu_custom_call.1} parent=1 // pred_region
      %v127 = vld [vmem:[#allocation2] sm:$0x3]
      %v129 = vlaneseq
      %v130 = vshrl.u32 %v129, 7
      %v131 = vsub.s32 0, %v130
      %v132 = vrot.slane %v127, %v131
      %v133 = vlaneseq
      %v134 = vshrl.u32 %v133, 7
      %v135 = vsub.s32 1, %v134
      %v136 = vrot.slane %v127, %v135
      %vm139 = vcmask 1040384
      %v140 = vsel %vm139, %v132, 0.0
      %v141 = vsel %vm139, %v136, 0.0
      %v142 = vadd.f32 %v140, %v141
      %143 = vadd.xlane.f32.xlu0 %v142
      %v144 = vpop.xlane.xlu0 %143
      %vm145 = vcmask 0
      %146 = vst.msk [vmem:[#allocation8] sm:$0x1] %vm145, %v144
    $region25: #{tpu_custom_call.1} parent=1 // pred_fallthru
      _
    // Predicated region
    $region26: #{tpu_custom_call.1} parent=1 // pred_check
      _
    $region27: #{tpu_custom_call.1} parent=1 // pred_check_branch
      %148 = sbr.rel (0) target = $region29
    $region28: #{tpu_custom_call.1} parent=1 // pred_region
      %s150 = ssub.s32 16, 16
      %151 = vsyncadd [#allocation5], %s150
      %s153 = sshll.u32 [#allocation8], 4
      %s154 = int_to_ptr.vmem [resolvable:$true] %s153
      %156 = dma.vmem_to_hbm [thread:$0]  %s154, 16, %s2, [#allocation5]
    $region29: #{tpu_custom_call.1} parent=1 // pred_fallthru
      _
    // Predicated region
    $region30: #{tpu_custom_call.1} parent=1 // pred_check
      _
    $region31: #{tpu_custom_call.1} parent=1 // pred_check_branch
      %158 = sbr.rel (0) target = $region33
    $region32: #{tpu_custom_call.1} parent=1 // pred_region
      %159 = dma.done [#allocation5], 16
    $region33: #{tpu_custom_call.1} parent=1 // pred_fallthru
      _
    %160 = vsyncpa [#allocation4], 1
    %161 = vsyncpa [#allocation7], 1
    %162 = vsyncpa [#allocation5], 1

</llo_original>
